<compile_context>
chip_gen: v7x
topology: tpu7x:2x2x1
jax: 0.10.0
libtpu: 0.0.40
codegen_flags: <defaults>
</compile_context>

<pallas_src>
import functools

import jax
import jax.numpy as jnp
from jax.experimental import pallas as pl
from jax.experimental.pallas import tpu as pltpu

# ----------------------------- problem sizes --------------------------------
N_BATCH = 128          # number of collocation points (example run)
D_IN = 2               # [x-coordinate, material parameter]
D_IN_PAD = 8           # layer-1 contraction dim zero-padded to 8 for the MXU
H = 32                 # hidden width of the network
D_OUT = 1              # displacement

LANE = 128             # lane width; batch axis is padded to a multiple of this
MAX_TILE_N = 16384     # batch tile cap (f32 temps ~10-12 MiB -> fits VMEM)

# ------------------------ normalization constants ---------------------------
X_MIN = (0.0, 170000.0)     # per-input-column min  (coordinate, parameter)
X_MAX = (0.1, 210000.0)     # per-input-column max
COOR_MIN, COOR_MAX = 0.0, 0.1
DISP_MIN, DISP_MAX = -0.01, 0.01
U_LEFT = 0.0                # prescribed displacement at the left boundary


def _round_up(v, m):
    return ((v + m - 1) // m) * m


# ------------------------------- kernel -------------------------------------
def _ansatz_kernel(xT_ref, w1t_ref, b1t_ref, w2t_ref, b2t_ref, w3t_ref,
                   b3t_ref, o_ref, *, u_left):
    """Batch-on-lanes forward: activations are (features, batch)."""
    xT = xT_ref[...]                                      # (D_IN_PAD, TILE_N)

    # ---- layer 1 on the MXU (contraction dim padded 2->8; input
    #      normalization already folded into w1t/b1t host-side) ----
    h1 = jnp.tanh(jnp.dot(w1t_ref[...], xT,
                          preferred_element_type=jnp.float32)
                  + b1t_ref[...])                         # (H, TILE_N)

    # ---- layer 2 (H x H on the MXU, lane-dense N) ----
    h2 = jnp.tanh(jnp.dot(w2t_ref[...], h1,
                          preferred_element_type=jnp.float32)
                  + b2t_ref[...])                         # (H, TILE_N)

    # ---- layer 3 (disp_range/coor_range folded into w3t/b3t host-side) ----
    net = jnp.dot(w3t_ref[...], h2,
                  preferred_element_type=jnp.float32) + b3t_ref[...]  # (1, TILE_N)

    # ---- hard-boundary-condition ansatz, fully fused: y = u_left + x_coor*net'
    o_ref[...] = u_left + xT[0:1, :] * net                # (1, TILE_N), lane-dense


# --------------------- host-side parameter folding (once) -------------------
def fold_params(params):
    """Fold input normalization into W1/b1 and ansatz scales into W3/b3;
    transpose to the (features, batch) layout. Call once per parameter set."""
    w1, b1, w2, b2, w3, b3 = params

    xmin = jnp.asarray(X_MIN, jnp.float32)
    xmax = jnp.asarray(X_MAX, jnp.float32)
    s = 2.0 / (xmax - xmin)                               # (D_IN,)
    c = -2.0 * xmin / (xmax - xmin) - 1.0                 # (D_IN,)
    w1f = s[:, None] * w1                                 # (D_IN, H)
    b1f = b1 + c[None, :] @ w1                            # (1, H)

    scale = (DISP_MAX - DISP_MIN) / (COOR_MAX - COOR_MIN)
    w3f = w3 * scale                                      # (H, D_OUT)
    b3f = b3 * scale                                      # (1, D_OUT)

    # transpose + zero-pad the layer-1 contraction dim to D_IN_PAD
    w1t = jnp.zeros((H, D_IN_PAD), jnp.float32).at[:, :D_IN].set(w1f.T)
    b1t = b1f.T                                           # (H, 1)
    w2t, b2t = w2.T, b2.T                                 # (H, H), (H, 1)
    w3t, b3t = w3f.T, b3f.T                               # (D_OUT, H), (D_OUT, 1)
    return (w1t, b1t, w2t, b2t, w3t, b3t)


# ------------------------------ tiling plan ----------------------------------
def _tile_plan(n):
    """Pick (tile_n, grid_steps, pad_n). >= 2 tiles whenever pad_n >= 256 so
    v7x's two TensorCores both get work; tiles capped at MAX_TILE_N."""
    pad0 = _round_up(max(n, 1), LANE)
    if pad0 <= LANE:
        tile_n = pad0
    else:
        steps = max(2, pl.cdiv(pad0, MAX_TILE_N))
        tile_n = min(MAX_TILE_N, _round_up(pl.cdiv(pad0, steps), LANE))
    grid_steps = pl.cdiv(pad0, tile_n)
    return tile_n, grid_steps, grid_steps * tile_n


def prepare_inputs(x, pad_n):
    """Transpose + zero-pad x to the (D_IN_PAD, pad_n) kernel layout.
    Hoist this out of the hot loop when the collocation points are reused."""
    n = x.shape[0]
    return jnp.zeros((D_IN_PAD, pad_n), jnp.float32).at[:D_IN, :n].set(x.T)


# --------------------------- kernel launcher ---------------------------------
def hbc_ansatz_forward_T(xT_pad, folded, *, tile_n, grid_steps):
    """Runs the kernel on pre-transposed/padded input; returns (1, pad_n)."""
    pad_n = xT_pad.shape[1]
    const = lambda i: (0, 0)
    kernel = functools.partial(_ansatz_kernel, u_left=U_LEFT)

    flops = 2 * pad_n * (D_IN_PAD * H + H * H + H * D_OUT) + 2 * pad_n
    transcendentals = 2 * H * pad_n
    bytes_accessed = 4 * (D_IN_PAD * pad_n + D_OUT * pad_n
                          + H * D_IN_PAD + H * H + H * D_OUT + 2 * H + D_OUT)

    return pl.pallas_call(
        kernel,
        out_shape=jax.ShapeDtypeStruct((D_OUT, pad_n), jnp.float32),
        grid_spec=pltpu.PrefetchScalarGridSpec(
            num_scalar_prefetch=0,
            grid=(grid_steps,),
            in_specs=[
                pl.BlockSpec((D_IN_PAD, tile_n), lambda i: (0, i)),  # x^T tile
                pl.BlockSpec((H, D_IN_PAD), const),                  # W1^T (folded, padded)
                pl.BlockSpec((H, 1), const),                         # b1^T (folded)
                pl.BlockSpec((H, H), const),                         # W2^T
                pl.BlockSpec((H, 1), const),                         # b2^T
                pl.BlockSpec((D_OUT, H), const),                     # W3^T (folded)
                pl.BlockSpec((D_OUT, 1), const),                     # b3^T (folded)
            ],
            out_specs=pl.BlockSpec((D_OUT, tile_n), lambda i: (0, i)),
        ),
        compiler_params=pltpu.CompilerParams(
            dimension_semantics=("parallel",)),
        cost_estimate=pl.CostEstimate(
            flops=flops, transcendentals=transcendentals,
            bytes_accessed=bytes_accessed),
    )(xT_pad, *folded)


@jax.jit
def normalized_hbc_ansatz_1d(x, params):
    """Convenience wrapper: x (N, 2) f32 -> y (N, 1) f32."""
    n = x.shape[0]
    folded = fold_params(params)                          # hoistable per param set
    tile_n, grid_steps, pad_n = _tile_plan(n)
    xT_pad = prepare_inputs(x, pad_n)                     # hoistable per point set
    yT = hbc_ansatz_forward_T(xT_pad, folded, tile_n=tile_n,
                              grid_steps=grid_steps)
    return yT[:, :n].T                                    # (N, 1)


# ------------------------------ reference ------------------------------------
def _reference(x, params):
    """Pure-JAX reference mirroring the PyTorch module (unfolded)."""
    w1, b1, w2, b2, w3, b3 = params
    xmin = jnp.asarray(X_MIN, jnp.float32)
    xmax = jnp.asarray(X_MAX, jnp.float32)
    norm_x = (x - xmin) / (xmax - xmin) * 2.0 - 1.0
    h1 = jnp.tanh(norm_x @ w1 + b1)
    h2 = jnp.tanh(h1 @ w2 + b2)
    net = h2 @ w3 + b3
    x_coor = x[:, 0:1]
    distance = x_coor / (COOR_MAX - COOR_MIN)
    boundary = U_LEFT / (DISP_MAX - DISP_MIN)
    norm_y = boundary + distance * net
    return norm_y * (DISP_MAX - DISP_MIN)


def _init_params(key):
    k1, k2, k3 = jax.random.split(key, 3)
    w1 = jax.random.normal(k1, (D_IN, H), jnp.float32) * (1.0 / jnp.sqrt(D_IN))
    b1 = jnp.zeros((1, H), jnp.float32)
    w2 = jax.random.normal(k2, (H, H), jnp.float32) * (1.0 / jnp.sqrt(H))
    b2 = jnp.zeros((1, H), jnp.float32)
    w3 = jax.random.normal(k3, (H, D_OUT), jnp.float32) * (1.0 / jnp.sqrt(H))
    b3 = jnp.zeros((1, D_OUT), jnp.float32)
    return (w1, b1, w2, b2, w3, b3)


if __name__ == "__main__":
    key = jax.random.PRNGKey(0)
    k_x, k_p = jax.random.split(key)
    params = _init_params(k_p)

    # inputs: column 0 = coordinate in [0, 0.1], column 1 = parameter in [170e3, 210e3]
    u = jax.random.uniform(k_x, (N_BATCH, D_IN), jnp.float32)
    lo = jnp.asarray([X_MIN[0], X_MIN[1]], jnp.float32)
    hi = jnp.asarray([X_MAX[0], X_MAX[1]], jnp.float32)
    x = lo + u * (hi - lo)

    out = normalized_hbc_ansatz_1d(x, params)
    out = jax.block_until_ready(out)

    ref = _reference(x, params)
    assert out.shape == (N_BATCH, D_OUT)
    assert jnp.allclose(out, ref, atol=1e-5, rtol=1e-4), (
        float(jnp.max(jnp.abs(out - ref))))
    print("KERNEL_OK")
</pallas_src>

<mosaic_0001>
module attributes {stable_mosaic.version = 11 : i64} {
  func.func @_ansatz_kernel(%arg0: i32, %arg1: memref<8x128xf32, #tpu.memory_space<vmem>>, %arg2: memref<32x8xf32, #tpu.memory_space<vmem>>, %arg3: memref<32x1xf32, #tpu.memory_space<vmem>>, %arg4: memref<32x32xf32, #tpu.memory_space<vmem>>, %arg5: memref<32x1xf32, #tpu.memory_space<vmem>>, %arg6: memref<1x32xf32, #tpu.memory_space<vmem>>, %arg7: memref<1x1xf32, #tpu.memory_space<vmem>>, %arg8: memref<1x128xf32, #tpu.memory_space<vmem>>) attributes {dimension_semantics = [#tpu.dimension_semantics<parallel>], iteration_bounds = array<i64: 1>, scalar_prefetch = 0 : i64, scratch_operands = 0 : i64, tpu.core_type = #tpu.core_type<tc>, window_params = [{transform_indices = @transform_0, window_bounds = array<i64: 8, 128>}, {pipeline_mode = #tpu.pipeline_mode<synchronous>, transform_indices = @transform_1, window_bounds = array<i64: 32, 8>}, {pipeline_mode = #tpu.pipeline_mode<synchronous>, transform_indices = @transform_2, window_bounds = array<i64: 32, 1>}, {pipeline_mode = #tpu.pipeline_mode<synchronous>, transform_indices = @transform_3, window_bounds = array<i64: 32, 32>}, {pipeline_mode = #tpu.pipeline_mode<synchronous>, transform_indices = @transform_4, window_bounds = array<i64: 32, 1>}, {pipeline_mode = #tpu.pipeline_mode<synchronous>, transform_indices = @transform_5, window_bounds = array<i64: 1, 32>}, {pipeline_mode = #tpu.pipeline_mode<synchronous>, transform_indices = @transform_6, window_bounds = array<i64: 1, 1>}, {transform_indices = @transform_7, window_bounds = array<i64: 1, 128>}]} {
    %c0 = arith.constant 0 : index
    %c0_0 = arith.constant 0 : index
    %0 = vector.load %arg1[%c0, %c0_0] : memref<8x128xf32, #tpu.memory_space<vmem>>, vector<8x128xf32>
    %c0_1 = arith.constant 0 : index
    %c0_2 = arith.constant 0 : index
    %1 = vector.load %arg2[%c0_1, %c0_2] : memref<32x8xf32, #tpu.memory_space<vmem>>, vector<32x8xf32>
    %cst = arith.constant dense<0.000000e+00> : vector<32x128xf32>
    %2 = tpu.matmul %1, %0, %cst {dimension_numbers = #tpu.dot_dimension_numbers<[1], [0], [0], [1], [0, 0, 1, 1], [], []>} : vector<32x8xf32>, vector<8x128xf32>, vector<32x128xf32> -> vector<32x128xf32>
    %c0_3 = arith.constant 0 : index
    %c0_4 = arith.constant 0 : index
    %3 = vector.load %arg3[%c0_3, %c0_4] : memref<32x1xf32, #tpu.memory_space<vmem>>, vector<32x1xf32>
    %4 = vector.broadcast %3 : vector<32x1xf32> to vector<32x128xf32>
    %5 = arith.addf %2, %4 : vector<32x128xf32>
    %6 = math.tanh %5 : vector<32x128xf32>
    %c0_5 = arith.constant 0 : index
    %c0_6 = arith.constant 0 : index
    %7 = vector.load %arg4[%c0_5, %c0_6] : memref<32x32xf32, #tpu.memory_space<vmem>>, vector<32x32xf32>
    %cst_7 = arith.constant dense<0.000000e+00> : vector<32x128xf32>
    %8 = tpu.matmul %7, %6, %cst_7 {dimension_numbers = #tpu.dot_dimension_numbers<[1], [0], [0], [1], [0, 0, 1, 1], [], []>} : vector<32x32xf32>, vector<32x128xf32>, vector<32x128xf32> -> vector<32x128xf32>
    %c0_8 = arith.constant 0 : index
    %c0_9 = arith.constant 0 : index
    %9 = vector.load %arg5[%c0_8, %c0_9] : memref<32x1xf32, #tpu.memory_space<vmem>>, vector<32x1xf32>
    %10 = vector.broadcast %9 : vector<32x1xf32> to vector<32x128xf32>
    %11 = arith.addf %8, %10 : vector<32x128xf32>
    %12 = math.tanh %11 : vector<32x128xf32>
    %c0_10 = arith.constant 0 : index
    %c0_11 = arith.constant 0 : index
    %13 = vector.load %arg6[%c0_10, %c0_11] : memref<1x32xf32, #tpu.memory_space<vmem>>, vector<1x32xf32>
    %cst_12 = arith.constant dense<0.000000e+00> : vector<1x128xf32>
    %14 = tpu.matmul %13, %12, %cst_12 {dimension_numbers = #tpu.dot_dimension_numbers<[1], [0], [0], [1], [0, 0, 1, 1], [], []>} : vector<1x32xf32>, vector<32x128xf32>, vector<1x128xf32> -> vector<1x128xf32>
    %c0_13 = arith.constant 0 : index
    %c0_14 = arith.constant 0 : index
    %15 = vector.load %arg7[%c0_13, %c0_14] : memref<1x1xf32, #tpu.memory_space<vmem>>, vector<1x1xf32>
    %16 = vector.broadcast %15 : vector<1x1xf32> to vector<1x128xf32>
    %17 = arith.addf %14, %16 : vector<1x128xf32>
    %18 = vector.extract_strided_slice %0 {offsets = [0, 0], sizes = [1, 128], strides = [1, 1]} : vector<8x128xf32> to vector<1x128xf32>
    %19 = arith.mulf %18, %17 : vector<1x128xf32>
    %cst_15 = arith.constant 0.000000e+00 : f32
    %20 = vector.broadcast %cst_15 : f32 to vector<1x128xf32>
    %21 = arith.addf %20, %19 : vector<1x128xf32>
    %c0_16 = arith.constant 0 : index
    %c0_17 = arith.constant 0 : index
    %22 = vector.load %arg8[%c0_16, %c0_17] : memref<1x128xf32, #tpu.memory_space<vmem>>, vector<1x128xf32>
    tpu.vector_store %arg8[%c0_16, %c0_17], %21 {strides = array<i32>} : memref<1x128xf32, #tpu.memory_space<vmem>>, vector<1x128xf32>,
    return
  }
  func.func @transform_0(%arg0: i32) -> (i32, i32) {
    %c0_i32 = arith.constant 0 : i32
    %c0_i32_0 = arith.constant 0 : i32
    return %c0_i32, %arg0 : i32, i32
  }
  func.func @transform_1(%arg0: i32) -> (i32, i32) {
    %c0_i32 = arith.constant 0 : i32
    %c0_i32_0 = arith.constant 0 : i32
    %c0_i32_1 = arith.constant 0 : i32
    return %c0_i32, %c0_i32_0 : i32, i32
  }
  func.func @transform_2(%arg0: i32) -> (i32, i32) {
    %c0_i32 = arith.constant 0 : i32
    %c0_i32_0 = arith.constant 0 : i32
    %c0_i32_1 = arith.constant 0 : i32
    return %c0_i32, %c0_i32_0 : i32, i32
  }
  func.func @transform_3(%arg0: i32) -> (i32, i32) {
    %c0_i32 = arith.constant 0 : i32
    %c0_i32_0 = arith.constant 0 : i32
    %c0_i32_1 = arith.constant 0 : i32
    return %c0_i32, %c0_i32_0 : i32, i32
  }
  func.func @transform_4(%arg0: i32) -> (i32, i32) {
    %c0_i32 = arith.constant 0 : i32
    %c0_i32_0 = arith.constant 0 : i32
    %c0_i32_1 = arith.constant 0 : i32
    return %c0_i32, %c0_i32_0 : i32, i32
  }
  func.func @transform_5(%arg0: i32) -> (i32, i32) {
    %c0_i32 = arith.constant 0 : i32
    %c0_i32_0 = arith.constant 0 : i32
    %c0_i32_1 = arith.constant 0 : i32
    return %c0_i32, %c0_i32_0 : i32, i32
  }
  func.func @transform_6(%arg0: i32) -> (i32, i32) {
    %c0_i32 = arith.constant 0 : i32
    %c0_i32_0 = arith.constant 0 : i32
    %c0_i32_1 = arith.constant 0 : i32
    return %c0_i32, %c0_i32_0 : i32, i32
  }
  func.func @transform_7(%arg0: i32) -> (i32, i32) {
    %c0_i32 = arith.constant 0 : i32
    %c0_i32_0 = arith.constant 0 : i32
    return %c0_i32, %arg0 : i32, i32
  }
}

</mosaic_0001>

<llo_original>
// kernel: normalized_hbc_ansatz_1d.1
$region0: #{normalized_hbc_ansatz_1d.1}
  #allocation0 [shape = 'u32[]', space=smem, size = 0x4, offset = 0x4, fixed_abs, tag = 'smem constant byte address 0x4 - core index']
  #allocation1 [shape = 'u32[144,128]{1,0:T(1,128)}', space=vmem, size = 0x12000, scoped, tag = 'internal scratch']
  #allocation2 [shape = 'f32[1,1]{1,0:T(1,128)S(1)}', space=vmem, size = 0x200, scoped, tag = 'scoped memory for normalized_hbc_ansatz_1d.1']
  %s0 = inlined_call_operand.vmem [shape: f32[8,128], index: 0, kind: input, shape index: {}]
  %s1 = inlined_call_operand.vmem [shape: f32[32,8], index: 1, kind: input, shape index: {}]
  %s2 = inlined_call_operand.vmem [shape: f32[32,1], index: 2, kind: input, shape index: {}]
  %s3 = inlined_call_operand.vmem [shape: f32[32,32], index: 3, kind: input, shape index: {}]
  %s4 = inlined_call_operand.vmem [shape: f32[32,1], index: 4, kind: input, shape index: {}]
  %s5 = inlined_call_operand.vmem [shape: f32[1,32], index: 5, kind: input, shape index: {}]
  %s6 = inlined_call_operand.<no memory space> [shape: f32[1,1], index: 6, kind: input, shape index: {}]
  %s7 = inlined_call_operand.hbm [shape: f32[1,128], index: 7, kind: output, shape index: {}]
  %s8 = sld [smem:[#allocation0]]
  $region38: #{normalized_hbc_ansatz_1d.1} parent=0
    _
  %s10 = ssub.s32 1, %s8
  %s11 = scalar_select 0, %s10, %s8
  %v12 = vstv %s6
  %13 = vst [vmem:[#allocation2] sm:$0x1] %v12
  $region1: #{normalized_hbc_ansatz_1d.1} parent=0
    #allocation3 [shape = 'u8[512]{0}', space=vmem, size = 0x400, scoped, tag = 'output window, operand 0, single buffered']
    #allocation4 [shape = 's32[1]{0}', space=sflag, size = 0x4, scoped, tag = 'scoped memory for normalized_hbc_ansatz_1d.1']
    %14 = vsyncpa [#allocation4], 0
    // Predicated region
    $region2: #{normalized_hbc_ansatz_1d.1} parent=1 // pred_check
      _
    $region3: #{normalized_hbc_ansatz_1d.1} parent=1 // pred_check_branch
      %16 = sbr.rel (0) target = $region5
    $region4: #{normalized_hbc_ansatz_1d.1} parent=1 // pred_region
      _
    $region5: #{normalized_hbc_ansatz_1d.1} parent=1 // pred_fallthru
      _
    // Predicated region
    $region6: #{normalized_hbc_ansatz_1d.1} parent=1 // pred_check
      _
    $region7: #{normalized_hbc_ansatz_1d.1} parent=1 // pred_check_branch
      %18 = sbr.rel (0) target = $region9
    $region8: #{normalized_hbc_ansatz_1d.1} parent=1 // pred_region
      _
    $region9: #{normalized_hbc_ansatz_1d.1} parent=1 // pred_fallthru
      _
    // Predicated region
    $region10: #{normalized_hbc_ansatz_1d.1} parent=1 // pred_check
      _
    $region11: #{normalized_hbc_ansatz_1d.1} parent=1 // pred_check_branch
      %20 = sbr.rel (0) target = $region13
    $region12: #{normalized_hbc_ansatz_1d.1} parent=1 // pred_region
      _
    $region13: #{normalized_hbc_ansatz_1d.1} parent=1 // pred_fallthru
      _
    // Predicated region
    $region14: #{normalized_hbc_ansatz_1d.1} parent=1 // pred_check
      _
    $region15: #{normalized_hbc_ansatz_1d.1} parent=1 // pred_check_branch
      %22 = sbr.rel (0) target = $region17
    $region16: #{normalized_hbc_ansatz_1d.1} parent=1 // pred_region
      _
    $region17: #{normalized_hbc_ansatz_1d.1} parent=1 // pred_fallthru
      _
    // Predicated region
    $region18: #{normalized_hbc_ansatz_1d.1} parent=1 // pred_check
      _
    $region19: #{normalized_hbc_ansatz_1d.1} parent=1 // pred_check_branch
      %24 = sbr.rel (0) target = $region21
    $region20: #{normalized_hbc_ansatz_1d.1} parent=1 // pred_region
      _
    $region21: #{normalized_hbc_ansatz_1d.1} parent=1 // pred_fallthru
      _
    // Predicated region
    $region22: #{normalized_hbc_ansatz_1d.1} parent=1 // pred_check
      _
    $region23: #{normalized_hbc_ansatz_1d.1} parent=1 // pred_check_branch
      %26 = sbr.rel (0) target = $region25
    $region24: #{normalized_hbc_ansatz_1d.1} parent=1 // pred_region
      _
    $region25: #{normalized_hbc_ansatz_1d.1} parent=1 // pred_fallthru
      _
    // Predicated region
    $region26: #{normalized_hbc_ansatz_1d.1} parent=1 // pred_check
      _
    $region27: #{normalized_hbc_ansatz_1d.1} parent=1 // pred_check_branch
      %28 = sbr.rel (0) target = $region29
    $region28: #{normalized_hbc_ansatz_1d.1} parent=1 // pred_region
      _
    $region29: #{normalized_hbc_ansatz_1d.1} parent=1 // pred_fallthru
      _
    %v29 = vld [vmem:[%s0] sm:$0xff]
    %v30 = vld [vmem:[%s1] sm:$0xff]
    %v31 = vld [vmem:[%s1 + $0x8] sm:$0xff]
    %v32 = vld [vmem:[%s1 + $0x10] sm:$0xff]
    %v33 = vld [vmem:[%s1 + $0x18] sm:$0xff]
    %v34 = vld [vmem:[%s2] sm:$0xff]
    %v35 = vld [vmem:[%s2 + $0x8] sm:$0xff]
    %v36 = vld [vmem:[%s2 + $0x10] sm:$0xff]
    %v37 = vld [vmem:[%s2 + $0x18] sm:$0xff]
    %39 = vset.pattern.permute.xlu0 0
    %40 = vperm.xlu0 %39, %v34
    %v41 = vpop.permute.xlu0 %40
    %44 = vset.pattern.permute.xlu0 0
    %45 = vperm.xlu0 %44, %v35
    %v46 = vpop.permute.xlu0 %45
    %49 = vset.pattern.permute.xlu0 0
    %50 = vperm.xlu0 %49, %v36
    %v51 = vpop.permute.xlu0 %50
    %54 = vset.pattern.permute.xlu0 0
    %55 = vperm.xlu0 %54, %v37
    %v56 = vpop.permute.xlu0 %55
    %vm58 = vcmask 64512
    %v60 = vsel %vm58, %v30, 0
    %v63 = vsel %vm58, %v31, 0
    %v66 = vsel %vm58, %v32, 0
    %v69 = vsel %vm58, %v33, 0
    %71 = vmatprep.subr.mxu0 0.0
    %72 = vmatpush1.msra.mxu0 %v29
    %73 = vmatprep.subr.mxu0 0.0
    %74 = vmatpush1.msra.mxu0 0.0
    %75 = vmatprep.subr.mxu0 0.0
    %76 = vmatpush1.msra.mxu0 0.0
    %77 = vmatprep.subr.mxu0 0.0
    %78 = vmatpush1.msra.mxu0 0.0
    %79 = vmatprep.subr.mxu0 0.0
    %80 = vmatpush1.msra.mxu0 0.0
    %81 = vmatprep.subr.mxu0 0.0
    %82 = vmatpush1.msra.mxu0 0.0
    %83 = vmatprep.subr.mxu0 0.0
    %84 = vmatpush1.msra.mxu0 0.0
    %85 = vmatprep.subr.mxu0 0.0
    %86 = vmatpush1.msra.mxu0 0.0
    %87 = vmatprep.subr.mxu0 0.0
    %88 = vmatpush1.msra.mxu0 0.0
    %89 = vmatprep.subr.mxu0 0.0
    %90 = vmatpush1.msra.mxu0 0.0
    %91 = vmatprep.subr.mxu0 0.0
    %92 = vmatpush1.msra.mxu0 0.0
    %93 = vmatprep.subr.mxu0 0.0
    %94 = vmatpush1.msra.mxu0 0.0
    %95 = vmatprep.subr.mxu0 0.0
    %96 = vmatpush1.msra.mxu0 0.0
    %97 = vmatprep.subr.mxu0 0.0
    %98 = vmatpush1.msra.mxu0 0.0
    %99 = vmatprep.subr.mxu0 0.0
    %100 = vmatpush1.msra.mxu0 0.0
    %101 = vmatprep.subr.mxu0 0.0
    %102 = vmatpush1.msra.mxu0 0.0
    %103 = vmatprep.subr.mxu0 0.0
    %104 = vmatpush1.msra.mxu0 0.0
    %105 = vmatprep.subr.mxu0 0.0
    %106 = vmatpush1.msra.mxu0 0.0
    %107 = vmatprep.subr.mxu0 0.0
    %108 = vmatpush1.msra.mxu0 0.0
    %109 = vmatprep.subr.mxu0 0.0
    %110 = vmatpush1.msra.mxu0 0.0
    %111 = vmatprep.subr.mxu0 0.0
    %112 = vmatpush1.msra.mxu0 0.0
    %113 = vmatprep.subr.mxu0 0.0
    %114 = vmatpush1.msra.mxu0 0.0
    %115 = vmatprep.subr.mxu0 0.0
    %116 = vmatpush1.msra.mxu0 0.0
    %117 = vmatprep.subr.mxu0 0.0
    %118 = vmatpush1.msra.mxu0 0.0
    %119 = vmatprep.subr.mxu0 0.0
    %120 = vmatpush1.msra.mxu0 0.0
    %121 = vmatprep.subr.mxu0 0.0
    %122 = vmatpush1.msra.mxu0 0.0
    %123 = vmatprep.subr.mxu0 0.0
    %124 = vmatpush1.msra.mxu0 0.0
    %125 = vmatprep.subr.mxu0 0.0
    %126 = vmatpush1.msra.mxu0 0.0
    %127 = vmatprep.subr.mxu0 0.0
    %128 = vmatpush1.msra.mxu0 0.0
    %129 = vmatprep.subr.mxu0 0.0
    %130 = vmatpush1.msra.mxu0 0.0
    %131 = vmatprep.subr.mxu0 0.0
    %132 = vmatpush1.msra.mxu0 0.0
    %133 = vmatprep.subr.mxu0 0.0
    %134 = vmatpush1.msra.mxu0 0.0
    %135 = vmatprep.mubr.f32.mxu0 0.0
    %136 = vmatmul.mubr.f32.gmra.mrb[0].mxu0 %v60
    %v137 = vpop.f32.mrb[0].mxu0
    %v138 = vadd.f32 %v41, %v137
    %v139 = vpop.f32.mrb[0].mxu0
    %140 = vmatprep.mubr.f32.mxu0 0.0
    %141 = vmatmul.mubr.f32.gmra.mrb[0].mxu0 %v63
    %v142 = vpop.f32.mrb[0].mxu0
    %v143 = vadd.f32 %v46, %v142
    %v144 = vpop.f32.mrb[0].mxu0
    %145 = vmatprep.mubr.f32.mxu0 0.0
    %146 = vmatmul.mubr.f32.gmra.mrb[0].mxu0 %v66
    %v147 = vpop.f32.mrb[0].mxu0
    %v148 = vadd.f32 %v51, %v147
    %v149 = vpop.f32.mrb[0].mxu0
    %150 = vmatprep.mubr.f32.mxu0 0.0
    %151 = vmatmul.mubr.f32.gmra.mrb[0].mxu0 %v69
    %v152 = vpop.f32.mrb[0].mxu0
    %v153 = vadd.f32 %v56, %v152
    %v154 = vpop.f32.mrb[0].mxu0
    %155 = vdwg.mxu0
    %v156 = vtanh.pop %v138
    %v157 = vtanh.pop %v143
    %v158 = vtanh.pop %v148
    %v159 = vtanh.pop %v153
    %v160 = vld [vmem:[%s3] sm:$0xff]
    %v161 = vld [vmem:[%s3 + $0x8] sm:$0xff]
    %v162 = vld [vmem:[%s3 + $0x10] sm:$0xff]
    %v163 = vld [vmem:[%s3 + $0x18] sm:$0xff]
    %v164 = vld [vmem:[%s4] sm:$0xff]
    %v165 = vld [vmem:[%s4 + $0x8] sm:$0xff]
    %v166 = vld [vmem:[%s4 + $0x10] sm:$0xff]
    %v167 = vld [vmem:[%s4 + $0x18] sm:$0xff]
    %169 = vset.pattern.permute.xlu0 0
    %170 = vperm.xlu0 %169, %v164
    %v171 = vpop.permute.xlu0 %170
    %174 = vset.pattern.permute.xlu0 0
    %175 = vperm.xlu0 %174, %v165
    %v176 = vpop.permute.xlu0 %175
    %179 = vset.pattern.permute.xlu0 0
    %180 = vperm.xlu0 %179, %v166
    %v181 = vpop.permute.xlu0 %180
    %184 = vset.pattern.permute.xlu0 0
    %185 = vperm.xlu0 %184, %v167
    %v186 = vpop.permute.xlu0 %185
    %vm188 = vcmask 261120
    %v190 = vsel %vm188, %v160, 0
    %v193 = vsel %vm188, %v161, 0
    %v196 = vsel %vm188, %v162, 0
    %v199 = vsel %vm188, %v163, 0
    %201 = vmatprep.subr.mxu0 0.0
    %202 = vmatpush1.msra.mxu0 %v156
    %203 = vmatprep.subr.mxu0 0.0
    %204 = vmatpush1.msra.mxu0 %v157
    %205 = vmatprep.subr.mxu0 0.0
    %206 = vmatpush1.msra.mxu0 %v158
    %207 = vmatprep.subr.mxu0 0.0
    %208 = vmatpush1.msra.mxu0 %v159
    %209 = vmatprep.subr.mxu0 0.0
    %210 = vmatpush1.msra.mxu0 0.0
    %211 = vmatprep.subr.mxu0 0.0
    %212 = vmatpush1.msra.mxu0 0.0
    %213 = vmatprep.subr.mxu0 0.0
    %214 = vmatpush1.msra.mxu0 0.0
    %215 = vmatprep.subr.mxu0 0.0
    %216 = vmatpush1.msra.mxu0 0.0
    %217 = vmatprep.subr.mxu0 0.0
    %218 = vmatpush1.msra.mxu0 0.0
    %219 = vmatprep.subr.mxu0 0.0
    %220 = vmatpush1.msra.mxu0 0.0
    %221 = vmatprep.subr.mxu0 0.0
    %222 = vmatpush1.msra.mxu0 0.0
    %223 = vmatprep.subr.mxu0 0.0
    %224 = vmatpush1.msra.mxu0 0.0
    %225 = vmatprep.subr.mxu0 0.0
    %226 = vmatpush1.msra.mxu0 0.0
    %227 = vmatprep.subr.mxu0 0.0
    %228 = vmatpush1.msra.mxu0 0.0
    %229 = vmatprep.subr.mxu0 0.0
    %230 = vmatpush1.msra.mxu0 0.0
    %231 = vmatprep.subr.mxu0 0.0
    %232 = vmatpush1.msra.mxu0 0.0
    %233 = vmatprep.subr.mxu0 0.0
    %234 = vmatpush1.msra.mxu0 0.0
    %235 = vmatprep.subr.mxu0 0.0
    %236 = vmatpush1.msra.mxu0 0.0
    %237 = vmatprep.subr.mxu0 0.0
    %238 = vmatpush1.msra.mxu0 0.0
    %239 = vmatprep.subr.mxu0 0.0
    %240 = vmatpush1.msra.mxu0 0.0
    %241 = vmatprep.subr.mxu0 0.0
    %242 = vmatpush1.msra.mxu0 0.0
    %243 = vmatprep.subr.mxu0 0.0
    %244 = vmatpush1.msra.mxu0 0.0
    %245 = vmatprep.subr.mxu0 0.0
    %246 = vmatpush1.msra.mxu0 0.0
    %247 = vmatprep.subr.mxu0 0.0
    %248 = vmatpush1.msra.mxu0 0.0
    %249 = vmatprep.subr.mxu0 0.0
    %250 = vmatpush1.msra.mxu0 0.0
    %251 = vmatprep.subr.mxu0 0.0
    %252 = vmatpush1.msra.mxu0 0.0
    %253 = vmatprep.subr.mxu0 0.0
    %254 = vmatpush1.msra.mxu0 0.0
    %255 = vmatprep.subr.mxu0 0.0
    %256 = vmatpush1.msra.mxu0 0.0
    %257 = vmatprep.subr.mxu0 0.0
    %258 = vmatpush1.msra.mxu0 0.0
    %259 = vmatprep.subr.mxu0 0.0
    %260 = vmatpush1.msra.mxu0 0.0
    %261 = vmatprep.subr.mxu0 0.0
    %262 = vmatpush1.msra.mxu0 0.0
    %263 = vmatprep.subr.mxu0 0.0
    %264 = vmatpush1.msra.mxu0 0.0
    %265 = vmatprep.mubr.f32.mxu0 0.0
    %266 = vmatmul.mubr.f32.gmra.mrb[0].mxu0 %v190
    %v267 = vpop.f32.mrb[0].mxu0
    %v268 = vadd.f32 %v171, %v267
    %v269 = vpop.f32.mrb[0].mxu0
    %270 = vmatprep.mubr.f32.mxu0 0.0
    %271 = vmatmul.mubr.f32.gmra.mrb[0].mxu0 %v193
    %v272 = vpop.f32.mrb[0].mxu0
    %v273 = vadd.f32 %v176, %v272
    %v274 = vpop.f32.mrb[0].mxu0
    %275 = vmatprep.mubr.f32.mxu0 0.0
    %276 = vmatmul.mubr.f32.gmra.mrb[0].mxu0 %v196
    %v277 = vpop.f32.mrb[0].mxu0
    %v278 = vadd.f32 %v181, %v277
    %v279 = vpop.f32.mrb[0].mxu0
    %280 = vmatprep.mubr.f32.mxu0 0.0
    %281 = vmatmul.mubr.f32.gmra.mrb[0].mxu0 %v199
    %v282 = vpop.f32.mrb[0].mxu0
    %v283 = vadd.f32 %v186, %v282
    %v284 = vpop.f32.mrb[0].mxu0
    %285 = vdwg.mxu0
    %v286 = vtanh.pop %v268
    %v287 = vtanh.pop %v273
    %v288 = vtanh.pop %v278
    %v289 = vtanh.pop %v283
    %v290 = vld [vmem:[%s5] sm:$0x1]
    %v291 = vld [vmem:[#allocation2] sm:$0x1]
    %293 = vset.pattern.permute.xlu0 0
    %294 = vperm.xlu0 %293, %v291
    %v295 = vpop.permute.xlu0 %294
    %v297 = vlaneseq
    %v298 = vshrl.u32 %v297, 7
    %v299 = vsub.s32 0, %v298
    %v300 = vrot.slane %v295, %v299
    %v302 = vsel %vm188, %v290, 0
    %304 = vmatprep.subr.mxu0 0.0
    %305 = vmatpush1.msra.mxu0 %v286
    %306 = vmatprep.subr.mxu0 0.0
    %307 = vmatpush1.msra.mxu0 %v287
    %308 = vmatprep.subr.mxu0 0.0
    %309 = vmatpush1.msra.mxu0 %v288
    %310 = vmatprep.subr.mxu0 0.0
    %311 = vmatpush1.msra.mxu0 %v289
    %312 = vmatprep.subr.mxu0 0.0
    %313 = vmatpush1.msra.mxu0 0.0
    %314 = vmatprep.subr.mxu0 0.0
    %315 = vmatpush1.msra.mxu0 0.0
    %316 = vmatprep.subr.mxu0 0.0
    %317 = vmatpush1.msra.mxu0 0.0
    %318 = vmatprep.subr.mxu0 0.0
    %319 = vmatpush1.msra.mxu0 0.0
    %320 = vmatprep.subr.mxu0 0.0
    %321 = vmatpush1.msra.mxu0 0.0
    %322 = vmatprep.subr.mxu0 0.0
    %323 = vmatpush1.msra.mxu0 0.0
    %324 = vmatprep.subr.mxu0 0.0
    %325 = vmatpush1.msra.mxu0 0.0
    %326 = vmatprep.subr.mxu0 0.0
    %327 = vmatpush1.msra.mxu0 0.0
    %328 = vmatprep.subr.mxu0 0.0
    %329 = vmatpush1.msra.mxu0 0.0
    %330 = vmatprep.subr.mxu0 0.0
    %331 = vmatpush1.msra.mxu0 0.0
    %332 = vmatprep.subr.mxu0 0.0
    %333 = vmatpush1.msra.mxu0 0.0
    %334 = vmatprep.subr.mxu0 0.0
    %335 = vmatpush1.msra.mxu0 0.0
    %336 = vmatprep.subr.mxu0 0.0
    %337 = vmatpush1.msra.mxu0 0.0
    %338 = vmatprep.subr.mxu0 0.0
    %339 = vmatpush1.msra.mxu0 0.0
    %340 = vmatprep.subr.mxu0 0.0
    %341 = vmatpush1.msra.mxu0 0.0
    %342 = vmatprep.subr.mxu0 0.0
    %343 = vmatpush1.msra.mxu0 0.0
    %344 = vmatprep.subr.mxu0 0.0
    %345 = vmatpush1.msra.mxu0 0.0
    %346 = vmatprep.subr.mxu0 0.0
    %347 = vmatpush1.msra.mxu0 0.0
    %348 = vmatprep.subr.mxu0 0.0
    %349 = vmatpush1.msra.mxu0 0.0
    %350 = vmatprep.subr.mxu0 0.0
    %351 = vmatpush1.msra.mxu0 0.0
    %352 = vmatprep.subr.mxu0 0.0
    %353 = vmatpush1.msra.mxu0 0.0
    %354 = vmatprep.subr.mxu0 0.0
    %355 = vmatpush1.msra.mxu0 0.0
    %356 = vmatprep.subr.mxu0 0.0
    %357 = vmatpush1.msra.mxu0 0.0
    %358 = vmatprep.subr.mxu0 0.0
    %359 = vmatpush1.msra.mxu0 0.0
    %360 = vmatprep.subr.mxu0 0.0
    %361 = vmatpush1.msra.mxu0 0.0
    %362 = vmatprep.subr.mxu0 0.0
    %363 = vmatpush1.msra.mxu0 0.0
    %364 = vmatprep.subr.mxu0 0.0
    %365 = vmatpush1.msra.mxu0 0.0
    %366 = vmatprep.subr.mxu0 0.0
    %367 = vmatpush1.msra.mxu0 0.0
    %368 = vmatprep.mubr.f32.mxu0 0.0
    %369 = vmatmul.mubr.f32.gmra.mrb[0].mxu0 %v302
    %v370 = vpop.f32.mrb[0].mxu0
    %v371 = vadd.f32 %v300, %v370
    %v372 = vpop.f32.mrb[0].mxu0
    %373 = vdwg.mxu0
    %v374 = vmul.f32 %v29, %v371
    %v375 = vadd.f32 %v374, 0.0
    %376 = vst [vmem:[#allocation3] sm:$0x1] %v375
    // Predicated region
    $region30: #{normalized_hbc_ansatz_1d.1} parent=1 // pred_check
      _
    $region31: #{normalized_hbc_ansatz_1d.1} parent=1 // pred_check_branch
      %378 = sbr.rel (0) target = $region33
    $region32: #{normalized_hbc_ansatz_1d.1} parent=1 // pred_region
      %s380 = ssub.s32 16, 16
      %381 = vsyncadd [#allocation4], %s380
      %s383 = sshll.u32 [#allocation3], 4
      %s384 = int_to_ptr.vmem [resolvable:$true] %s383
      %386 = dma.vmem_to_hbm [thread:$0]  %s384, 16, %s7, [#allocation4]
    $region33: #{normalized_hbc_ansatz_1d.1} parent=1 // pred_fallthru
      _
    // Predicated region
    $region34: #{normalized_hbc_ansatz_1d.1} parent=1 // pred_check
      _
    $region35: #{normalized_hbc_ansatz_1d.1} parent=1 // pred_check_branch
      %388 = sbr.rel (0) target = $region37
    $region36: #{normalized_hbc_ansatz_1d.1} parent=1 // pred_region
      %389 = dma.done [#allocation4], 16
    $region37: #{normalized_hbc_ansatz_1d.1} parent=1 // pred_fallthru
      _
    %390 = vsyncpa [#allocation4], 1

</llo_original>
